<compile_context>
chip_gen: v5e
topology: v5e:2x2
jax: 0.10.0
libtpu: 0.0.40
codegen_flags: <defaults>
</compile_context>

<pallas_src>
import functools

import jax
import jax.numpy as jnp
from jax.experimental import pallas as pl
from jax.experimental.pallas import tpu as pltpu


def _round_up(n, m):
    return ((n + m - 1) // m) * m


# ------------------------------ Pallas kernel ------------------------------ #
def _compl_channel_mix_kernel(xr_ref, xi_ref, wr_ref, wi_ref, or_ref, oi_ref):
    """Per-mode complex channel mixing on the VPU.

    xr/xi : (Cin, tm)        real / imag of retained Fourier modes
    wr/wi : (Cin, Cout, tm)  real / imag of per-mode spectral weights
    or/oi : (Cout, tm)       out[o,m] = sum_i x[i,m] * w[i,o,m]   (complex)

    The mode axis (tm, a multiple of 128) sits on lanes -> lane-dense.
    Cin/Cout are tiny, so the contraction is a static unroll of broadcast
    complex FMAs instead of a degenerate (tm,Cin)@(Cin,Cout) MXU matmul.
    """
    xr = xr_ref[...]
    xi = xi_ref[...]
    wr = wr_ref[...]
    wi = wi_ref[...]
    cin = xr.shape[0]

    # First term initializes the accumulators (saves a zero-init + add).
    a = xr[0:1, :]                              # (1, tm), broadcasts over Cout
    b = xi[0:1, :]
    acc_r = a * wr[0] - b * wi[0]               # (Cout, tm)
    acc_i = a * wi[0] + b * wr[0]
    for i in range(1, cin):                     # static unroll (Cin small)
        a = xr[i:i + 1, :]
        b = xi[i:i + 1, :]
        c = wr[i]
        d = wi[i]
        acc_r = acc_r + (a * c - b * d)
        acc_i = acc_i + (a * d + b * c)
    or_ref[...] = acc_r
    oi_ref[...] = acc_i


def _spectral_channel_mix(xr, xi, wr, wi, *, tm_max=4096):
    """out[b,o,m] = sum_i (xr+i*xi)[b,i,m] * (wr+i*wi)[i,o,m] -> (out_r, out_i).

    xr, xi: (B, Cin, M) float32
    wr, wi: (Cin, Cout, M) float32
    """
    B, Cin, M = xr.shape
    Cout = wr.shape[1]

    # Pad the flattened mode axis to a lane-friendly multiple of 128.  Only
    # the (tiny) retained-mode tensors are padded, never the full activation.
    Mp = _round_up(M, 128)
    if Mp <= tm_max:
        tm = Mp
    else:
        tm = tm_max
        Mp = _round_up(M, tm)
    pad = Mp - M
    if pad:
        p3 = ((0, 0), (0, 0), (0, pad))
        xr = jnp.pad(xr, p3)
        xi = jnp.pad(xi, p3)
        wr = jnp.pad(wr, p3)
        wi = jnp.pad(wi, p3)

    n_tiles = Mp // tm
    grid = (n_tiles, B)   # batch innermost: weight tile stays resident over it

    x_spec = pl.BlockSpec((None, Cin, tm), lambda t, b: (b, 0, t))
    w_spec = pl.BlockSpec((Cin, Cout, tm), lambda t, b: (0, 0, t))
    o_spec = pl.BlockSpec((None, Cout, tm), lambda t, b: (b, 0, t))

    flops = 8 * B * Cin * Cout * Mp          # 4 real mul + 4 real add / (i,o,m)
    bytes_accessed = 4 * (2 * B * Cin * Mp          # x real+imag
                          + 2 * Cin * Cout * Mp     # w real+imag
                          + 2 * B * Cout * Mp)      # out real+imag

    out_r, out_i = pl.pallas_call(
        _compl_channel_mix_kernel,
        out_shape=(jax.ShapeDtypeStruct((B, Cout, Mp), jnp.float32),
                   jax.ShapeDtypeStruct((B, Cout, Mp), jnp.float32)),
        grid_spec=pltpu.PrefetchScalarGridSpec(
            num_scalar_prefetch=0,
            grid=grid,
            in_specs=[x_spec, x_spec, w_spec, w_spec],
            out_specs=(o_spec, o_spec),
        ),
        compiler_params=pltpu.CompilerParams(
            dimension_semantics=("parallel", "parallel")),
        cost_estimate=pl.CostEstimate(
            flops=flops, transcendentals=0, bytes_accessed=bytes_accessed),
    )(xr, xi, wr, wi)

    return out_r[:, :, :M], out_i[:, :, :M]


# ------------------------- full module forward ----------------------------- #
def spectral_conv3d_uno_forward(x, w1, w2, w3, w4, *,
                                dim1, dim2, dim3, modes1, modes2, modes3):
    """SpectralConv3d_Uno.forward for NCDHW input x (complex weights w1..w4)."""
    B, Cin = x.shape[0], x.shape[1]
    Cout = w1.shape[1]
    m1, m2, m3 = modes1, modes2, modes3

    # TODO(synk): rfftn/irfftn have no Pallas primitive; the FFTs stay on XLA.
    x_ft = jnp.fft.rfftn(x, axes=(-3, -2, -1), norm='forward')

    # Same corner order as the PyTorch module (preserves the overwrite
    # semantics when corner slices overlap, e.g. the default modes1 == dim1).
    corners = (
        (slice(None, m1), slice(None, m2)),     # weights1
        (slice(-m1, None), slice(None, m2)),    # weights2
        (slice(None, m1), slice(-m2, None)),    # weights3
        (slice(-m1, None), slice(-m2, None)),   # weights4
    )
    s3 = slice(None, m3)
    M = m1 * m2 * m3

    # Concatenate the 4 corner blocks along the flattened mode axis so one
    # Pallas call with large lane-dense tiles handles everything.
    x_cat = jnp.concatenate(
        [x_ft[:, :, c1, c2, s3].reshape(B, Cin, M) for (c1, c2) in corners],
        axis=-1)                                        # (B, Cin, 4M) complex
    w_cat = jnp.concatenate(
        [w.reshape(Cin, Cout, M) for w in (w1, w2, w3, w4)],
        axis=-1)                                        # (Cin, Cout, 4M) complex

    o_r, o_i = _spectral_channel_mix(
        jnp.real(x_cat).astype(jnp.float32), jnp.imag(x_cat).astype(jnp.float32),
        jnp.real(w_cat).astype(jnp.float32), jnp.imag(w_cat).astype(jnp.float32))
    o_cplx = jax.lax.complex(o_r, o_i)                  # (B, Cout, 4M)

    out_ft = jnp.zeros((B, Cout, dim1, dim2, dim3 // 2 + 1), dtype=jnp.complex64)
    for idx, (c1, c2) in enumerate(corners):
        blk = o_cplx[:, :, idx * M:(idx + 1) * M].reshape(B, Cout, m1, m2, m3)
        out_ft = out_ft.at[:, :, c1, c2, s3].set(blk)

    return jnp.fft.irfftn(out_ft, s=(dim1, dim2, dim3), norm='forward')


# ------------------------ pure-JAX reference (check) ------------------------ #
def _reference_forward(x, w1, w2, w3, w4, dim1, dim2, dim3, m1, m2, m3):
    x_ft = jnp.fft.rfftn(x, axes=(-3, -2, -1), norm='forward')
    B = x.shape[0]
    Cout = w1.shape[1]
    cm = lambda a, w: jnp.einsum('bixyz,ioxyz->boxyz', a, w)
    out_ft = jnp.zeros((B, Cout, dim1, dim2, dim3 // 2 + 1), dtype=jnp.complex64)
    out_ft = out_ft.at[:, :, :m1, :m2, :m3].set(cm(x_ft[:, :, :m1, :m2, :m3], w1))
    out_ft = out_ft.at[:, :, -m1:, :m2, :m3].set(cm(x_ft[:, :, -m1:, :m2, :m3], w2))
    out_ft = out_ft.at[:, :, :m1, -m2:, :m3].set(cm(x_ft[:, :, :m1, -m2:, :m3], w3))
    out_ft = out_ft.at[:, :, -m1:, -m2:, :m3].set(cm(x_ft[:, :, -m1:, -m2:, :m3], w4))
    return jnp.fft.irfftn(out_ft, s=(dim1, dim2, dim3), norm='forward')


# ---------------------------------- main ----------------------------------- #
def _run_case(key, *, B, in_codim, out_codim, dims, modes):
    dim1, dim2, dim3 = dims
    modes1, modes2, modes3 = modes
    kx, k1, k2, k3, k4 = jax.random.split(key, 5)

    x = jax.random.normal(kx, (B, in_codim, dim1, dim2, dim3), dtype=jnp.float32)

    scale = (1.0 / (2 * in_codim)) ** 0.5
    wshape = (in_codim, out_codim, modes1, modes2, modes3)

    def make_w(k):
        kr, ki = jax.random.split(k)
        wre = jax.random.normal(kr, wshape, dtype=jnp.float32)
        wim = jax.random.normal(ki, wshape, dtype=jnp.float32)
        return (scale * (wre + 1j * wim)).astype(jnp.complex64)

    w1, w2, w3, w4 = make_w(k1), make_w(k2), make_w(k3), make_w(k4)

    fwd = jax.jit(functools.partial(
        spectral_conv3d_uno_forward,
        dim1=dim1, dim2=dim2, dim3=dim3,
        modes1=modes1, modes2=modes2, modes3=modes3))

    out = fwd(x, w1, w2, w3, w4)
    jax.block_until_ready(out)

    assert out.shape == (B, out_codim, dim1, dim2, dim3), out.shape
    assert bool(jnp.all(jnp.isfinite(out)))

    ref = _reference_forward(x, w1, w2, w3, w4, dim1, dim2, dim3,
                             modes1, modes2, modes3)
    max_err = float(jnp.max(jnp.abs(out - ref)))
    assert jnp.allclose(out, ref, atol=1e-4, rtol=1e-4), max_err


if __name__ == "__main__":
    # Small deterministic configs: in_codim = out_codim = 4, 8^3 grid, batch 2.
    key = jax.random.PRNGKey(0)
    k_a, k_b = jax.random.split(key)

    # Case A: disjoint corner blocks (modes = dim/2).
    _run_case(k_a, B=2, in_codim=4, out_codim=4,
              dims=(8, 8, 8), modes=(4, 4, 8 // 2 + 1))

    # Case B: default-mode config (modes1=dim1, modes2=dim2) -> overlapping
    # corners; checks the PyTorch overwrite-order semantics are preserved.
    _run_case(k_b, B=2, in_codim=4, out_codim=4,
              dims=(8, 8, 8), modes=(8, 8, 8 // 2 + 1))

    print("KERNEL_OK")
</pallas_src>

<mosaic_0001>
module attributes {stable_mosaic.version = 11 : i64} {
  func.func @_compl_channel_mix_kernel(%arg0: i32, %arg1: i32, %arg2: memref<1x4x384xf32, #tpu.memory_space<vmem>>, %arg3: memref<1x4x384xf32, #tpu.memory_space<vmem>>, %arg4: memref<4x4x384xf32, #tpu.memory_space<vmem>>, %arg5: memref<4x4x384xf32, #tpu.memory_space<vmem>>, %arg6: memref<1x4x384xf32, #tpu.memory_space<vmem>>, %arg7: memref<1x4x384xf32, #tpu.memory_space<vmem>>) attributes {dimension_semantics = [#tpu.dimension_semantics<parallel>, #tpu.dimension_semantics<parallel>], iteration_bounds = array<i64: 1, 2>, scalar_prefetch = 0 : i64, scratch_operands = 0 : i64, tpu.core_type = #tpu.core_type<tc>, window_params = [{transform_indices = @transform_0, window_bounds = array<i64: 1, 4, 384>}, {transform_indices = @transform_1, window_bounds = array<i64: 1, 4, 384>}, {transform_indices = @transform_2, window_bounds = array<i64: 4, 4, 384>}, {transform_indices = @transform_3, window_bounds = array<i64: 4, 4, 384>}, {transform_indices = @transform_4, window_bounds = array<i64: 1, 4, 384>}, {transform_indices = @transform_5, window_bounds = array<i64: 1, 4, 384>}]} {
    %c0 = arith.constant 0 : index
    %c0_0 = arith.constant 0 : index
    %c0_1 = arith.constant 0 : index
    %0 = vector.load %arg2[%c0, %c0_0, %c0_1] : memref<1x4x384xf32, #tpu.memory_space<vmem>>, vector<1x4x384xf32>
    %1 = vector.shape_cast %0 : vector<1x4x384xf32> to vector<4x384xf32>
    %c0_2 = arith.constant 0 : index
    %c0_3 = arith.constant 0 : index
    %c0_4 = arith.constant 0 : index
    %2 = vector.load %arg3[%c0_2, %c0_3, %c0_4] : memref<1x4x384xf32, #tpu.memory_space<vmem>>, vector<1x4x384xf32>
    %3 = vector.shape_cast %2 : vector<1x4x384xf32> to vector<4x384xf32>
    %c0_5 = arith.constant 0 : index
    %c0_6 = arith.constant 0 : index
    %c0_7 = arith.constant 0 : index
    %4 = vector.load %arg4[%c0_5, %c0_6, %c0_7] : memref<4x4x384xf32, #tpu.memory_space<vmem>>, vector<4x4x384xf32>
    %c0_8 = arith.constant 0 : index
    %c0_9 = arith.constant 0 : index
    %c0_10 = arith.constant 0 : index
    %5 = vector.load %arg5[%c0_8, %c0_9, %c0_10] : memref<4x4x384xf32, #tpu.memory_space<vmem>>, vector<4x4x384xf32>
    %6 = vector.extract_strided_slice %1 {offsets = [0, 0], sizes = [1, 384], strides = [1, 1]} : vector<4x384xf32> to vector<1x384xf32>
    %7 = vector.extract_strided_slice %3 {offsets = [0, 0], sizes = [1, 384], strides = [1, 1]} : vector<4x384xf32> to vector<1x384xf32>
    %8 = vector.extract_strided_slice %4 {offsets = [0, 0, 0], sizes = [1, 4, 384], strides = [1, 1, 1]} : vector<4x4x384xf32> to vector<1x4x384xf32>
    %9 = vector.shape_cast %8 : vector<1x4x384xf32> to vector<4x384xf32>
    %10 = vector.broadcast %6 : vector<1x384xf32> to vector<4x384xf32>
    %11 = arith.mulf %10, %9 : vector<4x384xf32>
    %12 = vector.extract_strided_slice %5 {offsets = [0, 0, 0], sizes = [1, 4, 384], strides = [1, 1, 1]} : vector<4x4x384xf32> to vector<1x4x384xf32>
    %13 = vector.shape_cast %12 : vector<1x4x384xf32> to vector<4x384xf32>
    %14 = vector.broadcast %7 : vector<1x384xf32> to vector<4x384xf32>
    %15 = arith.mulf %14, %13 : vector<4x384xf32>
    %16 = arith.subf %11, %15 : vector<4x384xf32>
    %17 = vector.extract_strided_slice %5 {offsets = [0, 0, 0], sizes = [1, 4, 384], strides = [1, 1, 1]} : vector<4x4x384xf32> to vector<1x4x384xf32>
    %18 = vector.shape_cast %17 : vector<1x4x384xf32> to vector<4x384xf32>
    %19 = vector.broadcast %6 : vector<1x384xf32> to vector<4x384xf32>
    %20 = arith.mulf %19, %18 : vector<4x384xf32>
    %21 = vector.extract_strided_slice %4 {offsets = [0, 0, 0], sizes = [1, 4, 384], strides = [1, 1, 1]} : vector<4x4x384xf32> to vector<1x4x384xf32>
    %22 = vector.shape_cast %21 : vector<1x4x384xf32> to vector<4x384xf32>
    %23 = vector.broadcast %7 : vector<1x384xf32> to vector<4x384xf32>
    %24 = arith.mulf %23, %22 : vector<4x384xf32>
    %25 = arith.addf %20, %24 : vector<4x384xf32>
    %26 = vector.extract_strided_slice %1 {offsets = [1, 0], sizes = [1, 384], strides = [1, 1]} : vector<4x384xf32> to vector<1x384xf32>
    %27 = vector.extract_strided_slice %3 {offsets = [1, 0], sizes = [1, 384], strides = [1, 1]} : vector<4x384xf32> to vector<1x384xf32>
    %28 = vector.extract_strided_slice %4 {offsets = [1, 0, 0], sizes = [1, 4, 384], strides = [1, 1, 1]} : vector<4x4x384xf32> to vector<1x4x384xf32>
    %29 = vector.shape_cast %28 : vector<1x4x384xf32> to vector<4x384xf32>
    %30 = vector.extract_strided_slice %5 {offsets = [1, 0, 0], sizes = [1, 4, 384], strides = [1, 1, 1]} : vector<4x4x384xf32> to vector<1x4x384xf32>
    %31 = vector.shape_cast %30 : vector<1x4x384xf32> to vector<4x384xf32>
    %32 = vector.broadcast %26 : vector<1x384xf32> to vector<4x384xf32>
    %33 = arith.mulf %32, %29 : vector<4x384xf32>
    %34 = vector.broadcast %27 : vector<1x384xf32> to vector<4x384xf32>
    %35 = arith.mulf %34, %31 : vector<4x384xf32>
    %36 = arith.subf %33, %35 : vector<4x384xf32>
    %37 = arith.addf %16, %36 : vector<4x384xf32>
    %38 = vector.broadcast %26 : vector<1x384xf32> to vector<4x384xf32>
    %39 = arith.mulf %38, %31 : vector<4x384xf32>
    %40 = vector.broadcast %27 : vector<1x384xf32> to vector<4x384xf32>
    %41 = arith.mulf %40, %29 : vector<4x384xf32>
    %42 = arith.addf %39, %41 : vector<4x384xf32>
    %43 = arith.addf %25, %42 : vector<4x384xf32>
    %44 = vector.extract_strided_slice %1 {offsets = [2, 0], sizes = [1, 384], strides = [1, 1]} : vector<4x384xf32> to vector<1x384xf32>
    %45 = vector.extract_strided_slice %3 {offsets = [2, 0], sizes = [1, 384], strides = [1, 1]} : vector<4x384xf32> to vector<1x384xf32>
    %46 = vector.extract_strided_slice %4 {offsets = [2, 0, 0], sizes = [1, 4, 384], strides = [1, 1, 1]} : vector<4x4x384xf32> to vector<1x4x384xf32>
    %47 = vector.shape_cast %46 : vector<1x4x384xf32> to vector<4x384xf32>
    %48 = vector.extract_strided_slice %5 {offsets = [2, 0, 0], sizes = [1, 4, 384], strides = [1, 1, 1]} : vector<4x4x384xf32> to vector<1x4x384xf32>
    %49 = vector.shape_cast %48 : vector<1x4x384xf32> to vector<4x384xf32>
    %50 = vector.broadcast %44 : vector<1x384xf32> to vector<4x384xf32>
    %51 = arith.mulf %50, %47 : vector<4x384xf32>
    %52 = vector.broadcast %45 : vector<1x384xf32> to vector<4x384xf32>
    %53 = arith.mulf %52, %49 : vector<4x384xf32>
    %54 = arith.subf %51, %53 : vector<4x384xf32>
    %55 = arith.addf %37, %54 : vector<4x384xf32>
    %56 = vector.broadcast %44 : vector<1x384xf32> to vector<4x384xf32>
    %57 = arith.mulf %56, %49 : vector<4x384xf32>
    %58 = vector.broadcast %45 : vector<1x384xf32> to vector<4x384xf32>
    %59 = arith.mulf %58, %47 : vector<4x384xf32>
    %60 = arith.addf %57, %59 : vector<4x384xf32>
    %61 = arith.addf %43, %60 : vector<4x384xf32>
    %62 = vector.extract_strided_slice %1 {offsets = [3, 0], sizes = [1, 384], strides = [1, 1]} : vector<4x384xf32> to vector<1x384xf32>
    %63 = vector.extract_strided_slice %3 {offsets = [3, 0], sizes = [1, 384], strides = [1, 1]} : vector<4x384xf32> to vector<1x384xf32>
    %64 = vector.extract_strided_slice %4 {offsets = [3, 0, 0], sizes = [1, 4, 384], strides = [1, 1, 1]} : vector<4x4x384xf32> to vector<1x4x384xf32>
    %65 = vector.shape_cast %64 : vector<1x4x384xf32> to vector<4x384xf32>
    %66 = vector.extract_strided_slice %5 {offsets = [3, 0, 0], sizes = [1, 4, 384], strides = [1, 1, 1]} : vector<4x4x384xf32> to vector<1x4x384xf32>
    %67 = vector.shape_cast %66 : vector<1x4x384xf32> to vector<4x384xf32>
    %68 = vector.broadcast %62 : vector<1x384xf32> to vector<4x384xf32>
    %69 = arith.mulf %68, %65 : vector<4x384xf32>
    %70 = vector.broadcast %63 : vector<1x384xf32> to vector<4x384xf32>
    %71 = arith.mulf %70, %67 : vector<4x384xf32>
    %72 = arith.subf %69, %71 : vector<4x384xf32>
    %73 = arith.addf %55, %72 : vector<4x384xf32>
    %74 = vector.broadcast %62 : vector<1x384xf32> to vector<4x384xf32>
    %75 = arith.mulf %74, %67 : vector<4x384xf32>
    %76 = vector.broadcast %63 : vector<1x384xf32> to vector<4x384xf32>
    %77 = arith.mulf %76, %65 : vector<4x384xf32>
    %78 = arith.addf %75, %77 : vector<4x384xf32>
    %79 = arith.addf %61, %78 : vector<4x384xf32>
    %c0_11 = arith.constant 0 : index
    %c0_12 = arith.constant 0 : index
    %c0_13 = arith.constant 0 : index
    %80 = vector.load %arg6[%c0_11, %c0_12, %c0_13] : memref<1x4x384xf32, #tpu.memory_space<vmem>>, vector<1x4x384xf32>
    %81 = vector.shape_cast %80 : vector<1x4x384xf32> to vector<4x384xf32>
    %82 = vector.shape_cast %73 : vector<4x384xf32> to vector<1x4x384xf32>
    tpu.vector_store %arg6[%c0_11, %c0_12, %c0_13], %82 {strides = array<i32>} : memref<1x4x384xf32, #tpu.memory_space<vmem>>, vector<1x4x384xf32>,
    %c0_14 = arith.constant 0 : index
    %c0_15 = arith.constant 0 : index
    %c0_16 = arith.constant 0 : index
    %83 = vector.load %arg7[%c0_14, %c0_15, %c0_16] : memref<1x4x384xf32, #tpu.memory_space<vmem>>, vector<1x4x384xf32>
    %84 = vector.shape_cast %83 : vector<1x4x384xf32> to vector<4x384xf32>
    %85 = vector.shape_cast %79 : vector<4x384xf32> to vector<1x4x384xf32>
    tpu.vector_store %arg7[%c0_14, %c0_15, %c0_16], %85 {strides = array<i32>} : memref<1x4x384xf32, #tpu.memory_space<vmem>>, vector<1x4x384xf32>,
    return
  }
  func.func @transform_0(%arg0: i32, %arg1: i32) -> (i32, i32, i32) {
    %c0_i32 = arith.constant 0 : i32
    %c0_i32_0 = arith.constant 0 : i32
    return %arg1, %c0_i32, %arg0 : i32, i32, i32
  }
  func.func @transform_1(%arg0: i32, %arg1: i32) -> (i32, i32, i32) {
    %c0_i32 = arith.constant 0 : i32
    %c0_i32_0 = arith.constant 0 : i32
    return %arg1, %c0_i32, %arg0 : i32, i32, i32
  }
  func.func @transform_2(%arg0: i32, %arg1: i32) -> (i32, i32, i32) {
    %c0_i32 = arith.constant 0 : i32
    %c0_i32_0 = arith.constant 0 : i32
    %c0_i32_1 = arith.constant 0 : i32
    return %c0_i32, %c0_i32_0, %arg0 : i32, i32, i32
  }
  func.func @transform_3(%arg0: i32, %arg1: i32) -> (i32, i32, i32) {
    %c0_i32 = arith.constant 0 : i32
    %c0_i32_0 = arith.constant 0 : i32
    %c0_i32_1 = arith.constant 0 : i32
    return %c0_i32, %c0_i32_0, %arg0 : i32, i32, i32
  }
  func.func @transform_4(%arg0: i32, %arg1: i32) -> (i32, i32, i32) {
    %c0_i32 = arith.constant 0 : i32
    %c0_i32_0 = arith.constant 0 : i32
    return %arg1, %c0_i32, %arg0 : i32, i32, i32
  }
  func.func @transform_5(%arg0: i32, %arg1: i32) -> (i32, i32, i32) {
    %c0_i32 = arith.constant 0 : i32
    %c0_i32_0 = arith.constant 0 : i32
    return %arg1, %c0_i32, %arg0 : i32, i32, i32
  }
}

</mosaic_0001>

<llo_original>
// kernel: custom-call.1
$region0: #{custom-call.1}
  %s0 = inlined_call_operand.hbm [shape: c64[4,4,4,4,5], index: 0, kind: input, shape index: {}]
  %s1 = inlined_call_operand.vmem [shape: f32[4,4,4,4,5], index: 1, kind: output, shape index: {}]
  %s2 = scalar_lea.hbm %s0, 256
  $region1: #{custom-call.1} parent=0
    #allocation0 [shape = 's32[1]{0}', space=sflag, size = 0x4, scoped, tag = 'scoped memory for custom-call.1']
    %3 = vsyncpa [#allocation0], 0
    %s5 = sshll.u32 %s2, 4
    %s6 = int_to_ptr.hbm [resolvable:$true] %s5
    %s7 = sshll.u32 %s1, 4
    %s8 = int_to_ptr.vmem [resolvable:$true] %s7
    %10 = dma.hbm_to_vmem [thread:$0]  %s6, 4096, %s8, [#allocation0]
    %12 = dma.done [#allocation0], 4096
    %13 = vsyncpa [#allocation0], 1

// kernel: custom-call
$region0: #{custom-call}
  %s0 = inlined_call_operand.hbm [shape: c64[4,4,4,4,5], index: 0, kind: input, shape index: {}]
  %s1 = inlined_call_operand.vmem [shape: f32[4,4,4,4,5], index: 1, kind: output, shape index: {}]
  $region1: #{custom-call} parent=0
    #allocation0 [shape = 's32[1]{0}', space=sflag, size = 0x4, scoped, tag = 'scoped memory for custom-call']
    %2 = vsyncpa [#allocation0], 0
    %s4 = sshll.u32 %s0, 4
    %s5 = int_to_ptr.hbm [resolvable:$true] %s4
    %s6 = sshll.u32 %s1, 4
    %s7 = int_to_ptr.vmem [resolvable:$true] %s6
    %9 = dma.hbm_to_vmem [thread:$0]  %s5, 4096, %s7, [#allocation0]
    %11 = dma.done [#allocation0], 4096
    %12 = vsyncpa [#allocation0], 1

// kernel: spectral_conv3d_uno_forward.1
$region0: #{spectral_conv3d_uno_forward.1}
  #allocation0 [shape = 'u32[]', space=smem, size = 0x4, offset = 0x4, fixed_abs, tag = 'smem constant byte address 0x4 - core index']
  #allocation1 [shape = 'u32[72,128]{1,0:T(1,128)}', space=vmem, size = 0x9000, scoped, tag = 'internal scratch']
  %s0 = inlined_call_operand.vmem [shape: f32[2,4,384], index: 0, kind: input, shape index: {}]
  %s1 = inlined_call_operand.vmem [shape: f32[2,4,384], index: 1, kind: input, shape index: {}]
  %s2 = inlined_call_operand.vmem [shape: f32[4,4,384], index: 2, kind: input, shape index: {}]
  %s3 = inlined_call_operand.vmem [shape: f32[4,4,384], index: 3, kind: input, shape index: {}]
  %s4 = inlined_call_operand.vmem [shape: f32[2,4,384], index: 4, kind: output, shape index: {0}]
  %s5 = inlined_call_operand.vmem [shape: f32[2,4,384], index: 5, kind: output, shape index: {1}]
  %6 = xla_tuple %s4, %s5
  %s7 = sld [smem:[#allocation0]]
  $region57: #{spectral_conv3d_uno_forward.1} parent=0
    _
  %s9 = ssub.s32 1, %s7
  %s10 = scalar_select 0, %s9, %s7
  loop: start=0, step=1, limit=4
  $region2: #{spectral_conv3d_uno_forward.1} parent=0 // loop_pre_header
    _
  $region3: #{spectral_conv3d_uno_forward.1} parent=0 // loop_header
    %s12 = sphi 0, %s16
    %p13 = scmp.ge.s32.totalorder %s12, 4
    %s19 = sphi 0, %s31
    %s20 = sphi 0, %s27
    %s21 = sphi 0, %s19
    %s22 = sphi 0, %s20
    %s23 = sphi 0, %s21
    %s24 = sphi 0, %s22
    %s36 = sphi 0, %s38
    %s39 = sphi 0, %s36
    %s40 = sphi 0, %s39
    %s56 = sphi 0, %s40
    %s64 = sphi 0, %s66
    %s67 = sphi 0, %s64
    %s68 = sphi 0, %s67
    %s84 = sphi 0, %s68
    %s90 = sphi 0, %s92
    %s93 = sphi 0, %s90
    %s94 = sphi 0, %s93
    %s110 = sphi 0, %s94
    %s116 = sphi 0, %s118
    %s119 = sphi 0, %s116
    %s120 = sphi 0, %s119
    %s136 = sphi 0, %s120
    %s144 = sphi 0, %s146
    %s147 = sphi 0, %s144
    %s148 = sphi 0, %s147
    %s164 = sphi 0, %s148
    %s172 = sphi 0, %s174
    %s175 = sphi 0, %s172
    %s176 = sphi 0, %s175
    %s192 = sphi 0, %s176
  $region4: #{spectral_conv3d_uno_forward.1} parent=0 // loop_header_branch
    %15 = sbr.rel (%p13) target = $region8
  $region5: #{spectral_conv3d_uno_forward.1} parent=0 // loop_body
    %s17 = ssub.s32 %s12, 1
    %s18 = ssub.s32 %s12, 2
    %s25 = sadd.s32 1, %s20
    %p26 = scmp.ge.s32.totalorder %s25, 2
    %s27 = scalar_select %p26, 0, %s25
    %s28 = sadd.s32 1, %s19
    %s29 = scalar_select %p26, %s28, %s19
    %p30 = scmp.ge.s32.totalorder %s29, 1
    %s31 = scalar_select %p30, 0, %s29
    %s32 = ssub.s32 %s20, %s27
    %s33 = ssub.s32 %s19, %s31
    %s34 = sor.u32 %s32, %s33
    %p35 = scmp.eq.s32.totalorder %s34, 0
    %s37 = sadd.s32 %s36, 1
    %s38 = scalar_select %p35, %s36, %s37
    %p41 = pneg %p35
    %p42 = scmp.eq.s32.totalorder %s12, 1
    %p43 = por %p41, %p42
    %p44 = scmp.ne.s32.totalorder %s36, %s39
    %p45 = scmp.eq.s32.totalorder %s12, 0
    %p46 = por %p44, %p45
    %p47 = scmp.ne.s32.totalorder %s36, %s39
    %p48 = scmp.eq.s32.totalorder %s17, 1
    %p49 = por %p47, %p48
    %p50 = scmp.ne.s32.totalorder %s39, %s40
    %p51 = scmp.eq.s32.totalorder %s17, 0
    %p52 = por %p50, %p51
    %p53 = scmp.ne.s32.totalorder %s39, %s40
    %p54 = scmp.eq.s32.totalorder %s18, 1
    %p55 = por %p53, %p54
    %p57 = scmp.ne.s32.totalorder %s40, %s56
    %p58 = scmp.eq.s32.totalorder %s18, 0
    %p59 = por %p57, %p58
    %s60 = ssub.s32 %s20, %s27
    %s61 = ssub.s32 %s19, %s31
    %s62 = sor.u32 %s60, %s61
    %p63 = scmp.eq.s32.totalorder %s62, 0
    %s65 = sadd.s32 %s64, 1
    %s66 = scalar_select %p63, %s64, %s65
    %p69 = pneg %p63
    %p70 = scmp.eq.s32.totalorder %s12, 1
    %p71 = por %p69, %p70
    %p72 = scmp.ne.s32.totalorder %s64, %s67
    %p73 = scmp.eq.s32.totalorder %s12, 0
    %p74 = por %p72, %p73
    %p75 = scmp.ne.s32.totalorder %s64, %s67
    %p76 = scmp.eq.s32.totalorder %s17, 1
    %p77 = por %p75, %p76
    %p78 = scmp.ne.s32.totalorder %s67, %s68
    %p79 = scmp.eq.s32.totalorder %s17, 0
    %p80 = por %p78, %p79
    %p81 = scmp.ne.s32.totalorder %s67, %s68
    %p82 = scmp.eq.s32.totalorder %s18, 1
    %p83 = por %p81, %p82
    %p85 = scmp.ne.s32.totalorder %s68, %s84
    %p86 = scmp.eq.s32.totalorder %s18, 0
    %p87 = por %p85, %p86
    %s88 = ssub.s32 %s19, %s31
    %p89 = scmp.eq.s32.totalorder %s88, 0
    %s91 = sadd.s32 %s90, 1
    %s92 = scalar_select %p89, %s90, %s91
    %p95 = pneg %p89
    %p96 = scmp.eq.s32.totalorder %s12, 1
    %p97 = por %p95, %p96
    %p98 = scmp.ne.s32.totalorder %s90, %s93
    %p99 = scmp.eq.s32.totalorder %s12, 0
    %p100 = por %p98, %p99
    %p101 = scmp.ne.s32.totalorder %s90, %s93
    %p102 = scmp.eq.s32.totalorder %s17, 1
    %p103 = por %p101, %p102
    %p104 = scmp.ne.s32.totalorder %s93, %s94
    %p105 = scmp.eq.s32.totalorder %s17, 0
    %p106 = por %p104, %p105
    %p107 = scmp.ne.s32.totalorder %s93, %s94
    %p108 = scmp.eq.s32.totalorder %s18, 1
    %p109 = por %p107, %p108
    %p111 = scmp.ne.s32.totalorder %s94, %s110
    %p112 = scmp.eq.s32.totalorder %s18, 0
    %p113 = por %p111, %p112
    %s114 = ssub.s32 %s19, %s31
    %p115 = scmp.eq.s32.totalorder %s114, 0
    %s117 = sadd.s32 %s116, 1
    %s118 = scalar_select %p115, %s116, %s117
    %p121 = pneg %p115
    %p122 = scmp.eq.s32.totalorder %s12, 1
    %p123 = por %p121, %p122
    %p124 = scmp.ne.s32.totalorder %s116, %s119
    %p125 = scmp.eq.s32.totalorder %s12, 0
    %p126 = por %p124, %p125
    %p127 = scmp.ne.s32.totalorder %s116, %s119
    %p128 = scmp.eq.s32.totalorder %s17, 1
    %p129 = por %p127, %p128
    %p130 = scmp.ne.s32.totalorder %s119, %s120
    %p131 = scmp.eq.s32.totalorder %s17, 0
    %p132 = por %p130, %p131
    %p133 = scmp.ne.s32.totalorder %s119, %s120
    %p134 = scmp.eq.s32.totalorder %s18, 1
    %p135 = por %p133, %p134
    %p137 = scmp.ne.s32.totalorder %s120, %s136
    %p138 = scmp.eq.s32.totalorder %s18, 0
    %p139 = por %p137, %p138
    %s140 = ssub.s32 %s20, %s27
    %s141 = ssub.s32 %s19, %s31
    %s142 = sor.u32 %s140, %s141
    %p143 = scmp.eq.s32.totalorder %s142, 0
    %s145 = sadd.s32 %s144, 1
    %s146 = scalar_select %p143, %s144, %s145
    %p149 = pneg %p143
    %p150 = scmp.eq.s32.totalorder %s12, 1
    %p151 = por %p149, %p150
    %p152 = scmp.ne.s32.totalorder %s144, %s147
    %p153 = scmp.eq.s32.totalorder %s12, 0
    %p154 = por %p152, %p153
    %p155 = scmp.ne.s32.totalorder %s144, %s147
    %p156 = scmp.eq.s32.totalorder %s17, 1
    %p157 = por %p155, %p156
    %p158 = scmp.ne.s32.totalorder %s147, %s148
    %p159 = scmp.eq.s32.totalorder %s17, 0
    %p160 = por %p158, %p159
    %p161 = scmp.ne.s32.totalorder %s147, %s148
    %p162 = scmp.eq.s32.totalorder %s18, 1
    %p163 = por %p161, %p162
    %p165 = scmp.ne.s32.totalorder %s148, %s164
    %p166 = scmp.eq.s32.totalorder %s18, 0
    %p167 = por %p165, %p166
    %s168 = ssub.s32 %s20, %s27
    %s169 = ssub.s32 %s19, %s31
    %s170 = sor.u32 %s168, %s169
    %p171 = scmp.eq.s32.totalorder %s170, 0
    %s173 = sadd.s32 %s172, 1
    %s174 = scalar_select %p171, %s172, %s173
    %p177 = pneg %p171
    %p178 = scmp.eq.s32.totalorder %s12, 1
    %p179 = por %p177, %p178
    %p180 = scmp.ne.s32.totalorder %s172, %s175
    %p181 = scmp.eq.s32.totalorder %s12, 0
    %p182 = por %p180, %p181
    %p183 = scmp.ne.s32.totalorder %s172, %s175
    %p184 = scmp.eq.s32.totalorder %s17, 1
    %p185 = por %p183, %p184
    %p186 = scmp.ne.s32.totalorder %s175, %s176
    %p187 = scmp.eq.s32.totalorder %s17, 0
    %p188 = por %p186, %p187
    %p189 = scmp.ne.s32.totalorder %s175, %s176
    %p190 = scmp.eq.s32.totalorder %s18, 1
    %p191 = por %p189, %p190
    %p193 = scmp.ne.s32.totalorder %s176, %s192
    %p194 = scmp.eq.s32.totalorder %s18, 0
    %p195 = por %p193, %p194
    %p196 = scmp.le.s32.totalorder 1, %s12
    %p197 = scmp.lt.s32.totalorder %s12, 3
    %p198 = pnand %p196, %p197
    %p199 = pneg %p198
    // Predicated region
    $region9: #{spectral_conv3d_uno_forward.1} parent=5 // pred_check
      _
    $region10: #{spectral_conv3d_uno_forward.1} parent=5 // pred_check_branch
      %201 = sbr.rel (%p198) target = $region12
    $region11: #{spectral_conv3d_uno_forward.1} parent=5 // pred_region
      %s202 = ssub.s32 %s12, 1
      // Predicated region
      $region13: #{spectral_conv3d_uno_forward.1} parent=11 // pred_check
        %p203 = pneg %p106
      $region14: #{spectral_conv3d_uno_forward.1} parent=11 // pred_check_branch
        %205 = sbr.rel (%p203) target = $region16
      $region15: #{spectral_conv3d_uno_forward.1} parent=11 // pred_region
        %s206 = smul.u32 3, %s21
        %p207 = scmp.lt.s32.totalorder %s206, 2
        %s208 = scalar_select %p207, %s206, 2
        %s209 = smul.addr %s208, 4
        %s210 = scalar_lea.vmem %s2, %s209
        %s211 = smul.u32 3, %s21
      $region16: #{spectral_conv3d_uno_forward.1} parent=11 // pred_fallthru
        _
      // Predicated region
      $region17: #{spectral_conv3d_uno_forward.1} parent=11 // pred_check
        %p212 = pneg %p132
      $region18: #{spectral_conv3d_uno_forward.1} parent=11 // pred_check_branch
        %214 = sbr.rel (%p212) target = $region20
      $region19: #{spectral_conv3d_uno_forward.1} parent=11 // pred_region
        %s215 = smul.u32 3, %s21
        %p216 = scmp.lt.s32.totalorder %s215, 2
        %s217 = scalar_select %p216, %s215, 2
        %s218 = smul.addr %s217, 4
        %s219 = scalar_lea.vmem %s3, %s218
        %s220 = smul.u32 3, %s21
      $region20: #{spectral_conv3d_uno_forward.1} parent=11 // pred_fallthru
        _
    $region12: #{spectral_conv3d_uno_forward.1} parent=5 // pred_fallthru
      _
    %p221 = scmp.lt.s32.totalorder %s12, 2
    // Predicated region
    $region21: #{spectral_conv3d_uno_forward.1} parent=5 // pred_check
      %p222 = pneg %p221
    $region22: #{spectral_conv3d_uno_forward.1} parent=5 // pred_check_branch
      %224 = sbr.rel (%p222) target = $region24
    $region23: #{spectral_conv3d_uno_forward.1} parent=5 // pred_region
      // Predicated region
      $region25: #{spectral_conv3d_uno_forward.1} parent=23 // pred_check
        %p225 = pneg %p46
      $region26: #{spectral_conv3d_uno_forward.1} parent=23 // pred_check_branch
        %227 = sbr.rel (%p225) target = $region28
      $region27: #{spectral_conv3d_uno_forward.1} parent=23 // pred_region
        %s228 = smul.u32 3, %s19
        %p229 = scmp.lt.s32.totalorder %s20, 1
        %s230 = scalar_select %p229, %s20, 1
        %p231 = scmp.lt.s32.totalorder %s228, 2
        %s232 = scalar_select %p231, %s228, 2
        %s233 = smul.addr %s230, 3
        %s234 = sadd.s32 %s232, %s233
        %s235 = smul.addr %s234, 4
        %s236 = scalar_lea.vmem %s0, %s235
        %s237 = smul.u32 3, %s19
      $region28: #{spectral_conv3d_uno_forward.1} parent=23 // pred_fallthru
        _
      // Predicated region
      $region29: #{spectral_conv3d_uno_forward.1} parent=23 // pred_check
        %p238 = pneg %p74
      $region30: #{spectral_conv3d_uno_forward.1} parent=23 // pred_check_branch
        %240 = sbr.rel (%p238) target = $region32
      $region31: #{spectral_conv3d_uno_forward.1} parent=23 // pred_region
        %s241 = smul.u32 3, %s19
        %p242 = scmp.lt.s32.totalorder %s20, 1
        %s243 = scalar_select %p242, %s20, 1
        %p244 = scmp.lt.s32.totalorder %s241, 2
        %s245 = scalar_select %p244, %s241, 2
        %s246 = smul.addr %s243, 3
        %s247 = sadd.s32 %s245, %s246
        %s248 = smul.addr %s247, 4
        %s249 = scalar_lea.vmem %s1, %s248
        %s250 = smul.u32 3, %s19
      $region32: #{spectral_conv3d_uno_forward.1} parent=23 // pred_fallthru
        _
    $region24: #{spectral_conv3d_uno_forward.1} parent=5 // pred_fallthru
      _
    %p251 = scmp.le.s32.totalorder 1, %s12
    %p252 = scmp.lt.s32.totalorder %s12, 3
    %p253 = pnand %p251, %p252
    %p254 = pneg %p253
    // Predicated region
    $region33: #{spectral_conv3d_uno_forward.1} parent=5 // pred_check
      _
    $region34: #{spectral_conv3d_uno_forward.1} parent=5 // pred_check_branch
      %256 = sbr.rel (%p253) target = $region36
    $region35: #{spectral_conv3d_uno_forward.1} parent=5 // pred_region
      %s257 = ssub.s32 %s12, 1
      %s258 = smul.u32 3, %s21
      %p259 = scmp.lt.s32.totalorder %s22, 1
      %s260 = scalar_select %p259, %s22, 1
      %p261 = scmp.lt.s32.totalorder %s258, 2
      %s262 = scalar_select %p261, %s258, 2
      %s263 = smul.addr %s260, 3
      %s264 = sadd.s32 %s262, %s263
      %s265 = smul.addr %s264, 4
      %s266 = scalar_lea.vmem %s0, %s265
      %p267 = pneg %p52
      %p268 = pneg %p49
      %s269 = smul.u32 3, %s21
      %p270 = scmp.lt.s32.totalorder %s22, 1
      %s271 = scalar_select %p270, %s22, 1
      %p272 = scmp.lt.s32.totalorder %s269, 2
      %s273 = scalar_select %p272, %s269, 2
      %s274 = smul.addr %s271, 3
      %s275 = sadd.s32 %s273, %s274
      %s276 = smul.addr %s275, 4
      %s277 = scalar_lea.vmem %s1, %s276
      %p278 = pneg %p80
      %p279 = pneg %p77
      %s280 = smul.u32 3, %s21
      %p281 = scmp.lt.s32.totalorder %s280, 2
      %s282 = scalar_select %p281, %s280, 2
      %s283 = smul.addr %s282, 4
      %s284 = scalar_lea.vmem %s2, %s283
      %p285 = pneg %p106
      %p286 = pneg %p103
      %s287 = smul.u32 3, %s21
      %p288 = scmp.lt.s32.totalorder %s287, 2
      %s289 = scalar_select %p288, %s287, 2
      %s290 = smul.addr %s289, 4
      %s291 = scalar_lea.vmem %s3, %s290
      %p292 = pneg %p132
      %p293 = pneg %p129
      %p294 = pneg %p160
      %p295 = pneg %p157
      %s296 = smul.u32 3, %s21
      %p297 = scmp.lt.s32.totalorder %s22, 1
      %s298 = scalar_select %p297, %s22, 1
      %p299 = scmp.lt.s32.totalorder %s296, 2
      %s300 = scalar_select %p299, %s296, 2
      %s301 = smul.addr %s298, 3
      %s302 = sadd.s32 %s300, %s301
      %s303 = smul.addr %s302, 4
      %s304 = scalar_lea.vmem %s4, %s303
      %p305 = pneg %p188
      %p306 = pneg %p185
      %s307 = smul.u32 3, %s21
      %p308 = scmp.lt.s32.totalorder %s22, 1
      %s309 = scalar_select %p308, %s22, 1
      %p310 = scmp.lt.s32.totalorder %s307, 2
      %s311 = scalar_select %p310, %s307, 2
      %s312 = smul.addr %s309, 3
      %s313 = sadd.s32 %s311, %s312
      %s314 = smul.addr %s313, 4
      %s315 = scalar_lea.vmem %s5, %s314
      %s316 = smul.u32 3, %s21
      %p317 = scmp.lt.s32.totalorder %s22, 1
      %s318 = scalar_select %p317, %s22, 1
      %p319 = scmp.lt.s32.totalorder %s316, 2
      %s320 = scalar_select %p319, %s316, 2
      %s321 = smul.addr %s318, 3
      %s322 = sadd.s32 %s320, %s321
      %s323 = smul.addr %s322, 4
      %s324 = scalar_lea.vmem %s0, %s323
      %s325 = smul.u32 3, %s21
      %s326 = smul.u32 3, %s21
      %p327 = scmp.lt.s32.totalorder %s22, 1
      %s328 = scalar_select %p327, %s22, 1
      %p329 = scmp.lt.s32.totalorder %s326, 2
      %s330 = scalar_select %p329, %s326, 2
      %s331 = smul.addr %s328, 3
      %s332 = sadd.s32 %s330, %s331
      %s333 = smul.addr %s332, 4
      %s334 = scalar_lea.vmem %s1, %s333
      %s335 = smul.u32 3, %s21
      %s336 = smul.u32 3, %s21
      %p337 = scmp.lt.s32.totalorder %s336, 2
      %s338 = scalar_select %p337, %s336, 2
      %s339 = smul.addr %s338, 4
      %s340 = scalar_lea.vmem %s2, %s339
      %s341 = smul.u32 3, %s21
      %s342 = smul.u32 3, %s21
      %p343 = scmp.lt.s32.totalorder %s342, 2
      %s344 = scalar_select %p343, %s342, 2
      %s345 = smul.addr %s344, 4
      %s346 = scalar_lea.vmem %s3, %s345
      %s347 = smul.u32 3, %s21
      %s348 = smul.u32 3, %s21
      %p349 = scmp.lt.s32.totalorder %s22, 1
      %s350 = scalar_select %p349, %s22, 1
      %p351 = scmp.lt.s32.totalorder %s348, 2
      %s352 = scalar_select %p351, %s348, 2
      %s353 = smul.addr %s350, 3
      %s354 = sadd.s32 %s352, %s353
      %s355 = smul.addr %s354, 4
      %s356 = scalar_lea.vmem %s4, %s355
      %s357 = smul.u32 3, %s21
      %s358 = smul.u32 3, %s21
      %p359 = scmp.lt.s32.totalorder %s22, 1
      %s360 = scalar_select %p359, %s22, 1
      %p361 = scmp.lt.s32.totalorder %s358, 2
      %s362 = scalar_select %p361, %s358, 2
      %s363 = smul.addr %s360, 3
      %s364 = sadd.s32 %s362, %s363
      %s365 = smul.addr %s364, 4
      %s366 = scalar_lea.vmem %s5, %s365
      %s367 = smul.u32 3, %s21
      %v368 = vld [vmem:[%s324] sm:$0xff]
      %v369 = vld [vmem:[%s324 + $0x8] sm:$0xf]
      %v370 = vld [vmem:[%s334] sm:$0xff]
      %v371 = vld [vmem:[%s334 + $0x8] sm:$0xf]
      %v372 = vld [vmem:[%s340] sm:$0xff]
      %v373 = vld [vmem:[%s340 + $0x8] sm:$0xf]
      %v374 = vld [vmem:[%s340 + $0xc] sm:$0xff]
      %v375 = vld [vmem:[%s340 + $0x14] sm:$0xf]
      %v376 = vld [vmem:[%s340 + $0x18] sm:$0xff]
      %v377 = vld [vmem:[%s340 + $0x20] sm:$0xf]
      %v378 = vld [vmem:[%s340 + $0x24] sm:$0xff]
      %v379 = vld [vmem:[%s340 + $0x2c] sm:$0xf]
      %v380 = vld [vmem:[%s346] sm:$0xff]
      %v381 = vld [vmem:[%s346 + $0x8] sm:$0xf]
      %v382 = vld [vmem:[%s346 + $0xc] sm:$0xff]
      %v383 = vld [vmem:[%s346 + $0x14] sm:$0xf]
      %v384 = vld [vmem:[%s346 + $0x18] sm:$0xff]
      %v385 = vld [vmem:[%s346 + $0x20] sm:$0xf]
      %v386 = vld [vmem:[%s346 + $0x24] sm:$0xff]
      %v387 = vld [vmem:[%s346 + $0x2c] sm:$0xf]
      %v390 = vperm.slane %v368, 0
      %v391 = vperm.slane %v368, 4
      %v392 = vperm.slane %v369, 0
      %v396 = vperm.slane %v390, 0
      %v397 = vperm.slane %v391, 0
      %v398 = vperm.slane %v392, 0
      %401 = vst [vmem:[#allocation1] ss:$2 sm:$0xff] %v372
      %s402 = scalar_lea.vmem [#allocation1], 16
      %403 = vst [vmem:[%s402] ss:$2 sm:$0xff] %v373
      %v404 = vld.sshfl [vmem:[#allocation1] sm:$0xff pattern:$0x75316420]
      %v405 = vld.sshfl [vmem:[#allocation1 + $0x8] sm:$0xff pattern:$0x75316420]
      %v406 = vld.sshfl [vmem:[#allocation1 + $0x10] sm:$0xff pattern:$0x75316420]
      %v410 = vmul.f32 %v396, %v404
      %v411 = vmul.f32 %v397, %v405
      %v412 = vmul.f32 %v398, %v406
      %v415 = vperm.slane %v370, 0
      %v416 = vperm.slane %v370, 4
      %v417 = vperm.slane %v371, 0
      %v421 = vperm.slane %v415, 0
      %v422 = vperm.slane %v416, 0
      %v423 = vperm.slane %v417, 0
      %426 = vst [vmem:[#allocation1] ss:$2 sm:$0xff] %v380
      %s427 = scalar_lea.vmem [#allocation1], 16
      %428 = vst [vmem:[%s427] ss:$2 sm:$0xff] %v381
      %v429 = vld.sshfl [vmem:[#allocation1] sm:$0xff pattern:$0x75316420]
      %v430 = vld.sshfl [vmem:[#allocation1 + $0x8] sm:$0xff pattern:$0x75316420]
      %v431 = vld.sshfl [vmem:[#allocation1 + $0x10] sm:$0xff pattern:$0x75316420]
      %v435 = vmul.f32 %v421, %v429
      %v436 = vmul.f32 %v422, %v430
      %v437 = vmul.f32 %v423, %v431
      %v438 = vsub.f32 %v410, %v435
      %v439 = vsub.f32 %v411, %v436
      %v440 = vsub.f32 %v412, %v437
      %441 = vst [vmem:[#allocation1] ss:$2 sm:$0xff] %v380
      %s442 = scalar_lea.vmem [#allocation1], 16
      %443 = vst [vmem:[%s442] ss:$2 sm:$0xff] %v381
      %v444 = vld.sshfl [vmem:[#allocation1] sm:$0xff pattern:$0x75316420]
      %v445 = vld.sshfl [vmem:[#allocation1 + $0x8] sm:$0xff pattern:$0x75316420]
      %v446 = vld.sshfl [vmem:[#allocation1 + $0x10] sm:$0xff pattern:$0x75316420]
      %v450 = vmul.f32 %v396, %v444
      %v451 = vmul.f32 %v397, %v445
      %v452 = vmul.f32 %v398, %v446
      %453 = vst [vmem:[#allocation1] ss:$2 sm:$0xff] %v372
      %s454 = scalar_lea.vmem [#allocation1], 16
      %455 = vst [vmem:[%s454] ss:$2 sm:$0xff] %v373
      %v456 = vld.sshfl [vmem:[#allocation1] sm:$0xff pattern:$0x75316420]
      %v457 = vld.sshfl [vmem:[#allocation1 + $0x8] sm:$0xff pattern:$0x75316420]
      %v458 = vld.sshfl [vmem:[#allocation1 + $0x10] sm:$0xff pattern:$0x75316420]
      %v462 = vmul.f32 %v421, %v456
      %v463 = vmul.f32 %v422, %v457
      %v464 = vmul.f32 %v423, %v458
      %v465 = vadd.f32 %v450, %v462
      %v466 = vadd.f32 %v451, %v463
      %v467 = vadd.f32 %v452, %v464
      %v468 = vperm.slane %v368, 1
      %v469 = vperm.slane %v368, 5
      %v470 = vperm.slane %v369, 1
      %v474 = vperm.slane %v468, 1
      %v475 = vperm.slane %v469, 1
      %v476 = vperm.slane %v470, 1
      %479 = vst [vmem:[#allocation1] ss:$2 sm:$0xff] %v374
      %s480 = scalar_lea.vmem [#allocation1], 16
      %481 = vst [vmem:[%s480] ss:$2 sm:$0xff] %v375
      %v482 = vld.sshfl [vmem:[#allocation1] sm:$0xff pattern:$0x75316420]
      %v483 = vld.sshfl [vmem:[#allocation1 + $0x8] sm:$0xff pattern:$0x75316420]
      %v484 = vld.sshfl [vmem:[#allocation1 + $0x10] sm:$0xff pattern:$0x75316420]
      %v488 = vmul.f32 %v474, %v482
      %v489 = vmul.f32 %v475, %v483
      %v490 = vmul.f32 %v476, %v484
      %v491 = vperm.slane %v370, 1
      %v492 = vperm.slane %v370, 5
      %v493 = vperm.slane %v371, 1
      %v497 = vperm.slane %v491, 1
      %v498 = vperm.slane %v492, 1
      %v499 = vperm.slane %v493, 1
      %502 = vst [vmem:[#allocation1] ss:$2 sm:$0xff] %v382
      %s503 = scalar_lea.vmem [#allocation1], 16
      %504 = vst [vmem:[%s503] ss:$2 sm:$0xff] %v383
      %v505 = vld.sshfl [vmem:[#allocation1] sm:$0xff pattern:$0x75316420]
      %v506 = vld.sshfl [vmem:[#allocation1 + $0x8] sm:$0xff pattern:$0x75316420]
      %v507 = vld.sshfl [vmem:[#allocation1 + $0x10] sm:$0xff pattern:$0x75316420]
      %v511 = vmul.f32 %v497, %v505
      %v512 = vmul.f32 %v498, %v506
      %v513 = vmul.f32 %v499, %v507
      %v514 = vsub.f32 %v488, %v511
      %v515 = vsub.f32 %v489, %v512
      %v516 = vsub.f32 %v490, %v513
      %v517 = vadd.f32 %v438, %v514
      %v518 = vadd.f32 %v439, %v515
      %v519 = vadd.f32 %v440, %v516
      %520 = vst [vmem:[#allocation1] ss:$2 sm:$0xff] %v382
      %s521 = scalar_lea.vmem [#allocation1], 16
      %522 = vst [vmem:[%s521] ss:$2 sm:$0xff] %v383
      %v523 = vld.sshfl [vmem:[#allocation1] sm:$0xff pattern:$0x75316420]
      %v524 = vld.sshfl [vmem:[#allocation1 + $0x8] sm:$0xff pattern:$0x75316420]
      %v525 = vld.sshfl [vmem:[#allocation1 + $0x10] sm:$0xff pattern:$0x75316420]
      %v529 = vmul.f32 %v474, %v523
      %v530 = vmul.f32 %v475, %v524
      %v531 = vmul.f32 %v476, %v525
      %532 = vst [vmem:[#allocation1] ss:$2 sm:$0xff] %v374
      %s533 = scalar_lea.vmem [#allocation1], 16
      %534 = vst [vmem:[%s533] ss:$2 sm:$0xff] %v375
      %v535 = vld.sshfl [vmem:[#allocation1] sm:$0xff pattern:$0x75316420]
      %v536 = vld.sshfl [vmem:[#allocation1 + $0x8] sm:$0xff pattern:$0x75316420]
      %v537 = vld.sshfl [vmem:[#allocation1 + $0x10] sm:$0xff pattern:$0x75316420]
      %v541 = vmul.f32 %v497, %v535
      %v542 = vmul.f32 %v498, %v536
      %v543 = vmul.f32 %v499, %v537
      %v544 = vadd.f32 %v529, %v541
      %v545 = vadd.f32 %v530, %v542
      %v546 = vadd.f32 %v531, %v543
      %v547 = vadd.f32 %v465, %v544
      %v548 = vadd.f32 %v466, %v545
      %v549 = vadd.f32 %v467, %v546
      %v550 = vperm.slane %v368, 2
      %v551 = vperm.slane %v368, 6
      %v552 = vperm.slane %v369, 2
      %v556 = vperm.slane %v550, 2
      %v557 = vperm.slane %v551, 2
      %v558 = vperm.slane %v552, 2
      %561 = vst [vmem:[#allocation1] ss:$2 sm:$0xff] %v376
      %s562 = scalar_lea.vmem [#allocation1], 16
      %563 = vst [vmem:[%s562] ss:$2 sm:$0xff] %v377
      %v564 = vld.sshfl [vmem:[#allocation1] sm:$0xff pattern:$0x75316420]
      %v565 = vld.sshfl [vmem:[#allocation1 + $0x8] sm:$0xff pattern:$0x75316420]
      %v566 = vld.sshfl [vmem:[#allocation1 + $0x10] sm:$0xff pattern:$0x75316420]
      %v570 = vmul.f32 %v556, %v564
      %v571 = vmul.f32 %v557, %v565
      %v572 = vmul.f32 %v558, %v566
      %v573 = vperm.slane %v370, 2
      %v574 = vperm.slane %v370, 6
      %v575 = vperm.slane %v371, 2
      %v579 = vperm.slane %v573, 2
      %v580 = vperm.slane %v574, 2
      %v581 = vperm.slane %v575, 2
      %584 = vst [vmem:[#allocation1] ss:$2 sm:$0xff] %v384
      %s585 = scalar_lea.vmem [#allocation1], 16
      %586 = vst [vmem:[%s585] ss:$2 sm:$0xff] %v385
      %v587 = vld.sshfl [vmem:[#allocation1] sm:$0xff pattern:$0x75316420]
      %v588 = vld.sshfl [vmem:[#allocation1 + $0x8] sm:$0xff pattern:$0x75316420]
      %v589 = vld.sshfl [vmem:[#allocation1 + $0x10] sm:$0xff pattern:$0x75316420]
      %v593 = vmul.f32 %v579, %v587
      %v594 = vmul.f32 %v580, %v588
      %v595 = vmul.f32 %v581, %v589
      %v596 = vsub.f32 %v570, %v593
      %v597 = vsub.f32 %v571, %v594
      %v598 = vsub.f32 %v572, %v595
      %v599 = vadd.f32 %v517, %v596
      %v600 = vadd.f32 %v518, %v597
      %v601 = vadd.f32 %v519, %v598
      %602 = vst [vmem:[#allocation1] ss:$2 sm:$0xff] %v384
      %s603 = scalar_lea.vmem [#allocation1], 16
      %604 = vst [vmem:[%s603] ss:$2 sm:$0xff] %v385
      %v605 = vld.sshfl [vmem:[#allocation1] sm:$0xff pattern:$0x75316420]
      %v606 = vld.sshfl [vmem:[#allocation1 + $0x8] sm:$0xff pattern:$0x75316420]
      %v607 = vld.sshfl [vmem:[#allocation1 + $0x10] sm:$0xff pattern:$0x75316420]
      %v611 = vmul.f32 %v556, %v605
      %v612 = vmul.f32 %v557, %v606
      %v613 = vmul.f32 %v558, %v607
      %614 = vst [vmem:[#allocation1] ss:$2 sm:$0xff] %v376
      %s615 = scalar_lea.vmem [#allocation1], 16
      %616 = vst [vmem:[%s615] ss:$2 sm:$0xff] %v377
      %v617 = vld.sshfl [vmem:[#allocation1] sm:$0xff pattern:$0x75316420]
      %v618 = vld.sshfl [vmem:[#allocation1 + $0x8] sm:$0xff pattern:$0x75316420]
      %v619 = vld.sshfl [vmem:[#allocation1 + $0x10] sm:$0xff pattern:$0x75316420]
      %v623 = vmul.f32 %v579, %v617
      %v624 = vmul.f32 %v580, %v618
      %v625 = vmul.f32 %v581, %v619
      %v626 = vadd.f32 %v611, %v623
      %v627 = vadd.f32 %v612, %v624
      %v628 = vadd.f32 %v613, %v625
      %v629 = vadd.f32 %v547, %v626
      %v630 = vadd.f32 %v548, %v627
      %v631 = vadd.f32 %v549, %v628
      %v632 = vperm.slane %v368, 3
      %v633 = vperm.slane %v368, 7
      %v634 = vperm.slane %v369, 3
      %v638 = vperm.slane %v632, 3
      %v639 = vperm.slane %v633, 3
      %v640 = vperm.slane %v634, 3
      %643 = vst [vmem:[#allocation1] ss:$2 sm:$0xff] %v378
      %s644 = scalar_lea.vmem [#allocation1], 16
      %645 = vst [vmem:[%s644] ss:$2 sm:$0xff] %v379
      %v646 = vld.sshfl [vmem:[#allocation1] sm:$0xff pattern:$0x75316420]
      %v647 = vld.sshfl [vmem:[#allocation1 + $0x8] sm:$0xff pattern:$0x75316420]
      %v648 = vld.sshfl [vmem:[#allocation1 + $0x10] sm:$0xff pattern:$0x75316420]
      %v652 = vmul.f32 %v638, %v646
      %v653 = vmul.f32 %v639, %v647
      %v654 = vmul.f32 %v640, %v648
      %v655 = vperm.slane %v370, 3
      %v656 = vperm.slane %v370, 7
      %v657 = vperm.slane %v371, 3
      %v661 = vperm.slane %v655, 3
      %v662 = vperm.slane %v656, 3
      %v663 = vperm.slane %v657, 3
      %666 = vst [vmem:[#allocation1] ss:$2 sm:$0xff] %v386
      %s667 = scalar_lea.vmem [#allocation1], 16
      %668 = vst [vmem:[%s667] ss:$2 sm:$0xff] %v387
      %v669 = vld.sshfl [vmem:[#allocation1] sm:$0xff pattern:$0x75316420]
      %v670 = vld.sshfl [vmem:[#allocation1 + $0x8] sm:$0xff pattern:$0x75316420]
      %v671 = vld.sshfl [vmem:[#allocation1 + $0x10] sm:$0xff pattern:$0x75316420]
      %v675 = vmul.f32 %v661, %v669
      %v676 = vmul.f32 %v662, %v670
      %v677 = vmul.f32 %v663, %v671
      %v678 = vsub.f32 %v652, %v675
      %v679 = vsub.f32 %v653, %v676
      %v680 = vsub.f32 %v654, %v677
      %v681 = vadd.f32 %v599, %v678
      %v682 = vadd.f32 %v600, %v679
      %v683 = vadd.f32 %v601, %v680
      %684 = vst [vmem:[#allocation1] ss:$2 sm:$0xff] %v386
      %s685 = scalar_lea.vmem [#allocation1], 16
      %686 = vst [vmem:[%s685] ss:$2 sm:$0xff] %v387
      %v687 = vld.sshfl [vmem:[#allocation1] sm:$0xff pattern:$0x75316420]
      %v688 = vld.sshfl [vmem:[#allocation1 + $0x8] sm:$0xff pattern:$0x75316420]
      %v689 = vld.sshfl [vmem:[#allocation1 + $0x10] sm:$0xff pattern:$0x75316420]
      %v693 = vmul.f32 %v638, %v687
      %v694 = vmul.f32 %v639, %v688
      %v695 = vmul.f32 %v640, %v689
      %696 = vst [vmem:[#allocation1] ss:$2 sm:$0xff] %v378
      %s697 = scalar_lea.vmem [#allocation1], 16
      %698 = vst [vmem:[%s697] ss:$2 sm:$0xff] %v379
      %v699 = vld.sshfl [vmem:[#allocation1] sm:$0xff pattern:$0x75316420]
      %v700 = vld.sshfl [vmem:[#allocation1 + $0x8] sm:$0xff pattern:$0x75316420]
      %v701 = vld.sshfl [vmem:[#allocation1 + $0x10] sm:$0xff pattern:$0x75316420]
      %v705 = vmul.f32 %v661, %v699
      %v706 = vmul.f32 %v662, %v700
      %v707 = vmul.f32 %v663, %v701
      %v708 = vadd.f32 %v693, %v705
      %v709 = vadd.f32 %v694, %v706
      %v710 = vadd.f32 %v695, %v707
      %v711 = vadd.f32 %v629, %v708
      %v712 = vadd.f32 %v630, %v709
      %v713 = vadd.f32 %v631, %v710
      %v716 = vrot.slane %v682, 4
      %vm717 = vcmask 1043456
      %v718 = vsel %vm717, %v681, %v716
      %720 = vst [vmem:[%s356] sm:$0xff] %v718
      %721 = vst [vmem:[%s356 + $0x8] sm:$0xf] %v683
      %v724 = vrot.slane %v712, 4
      %v725 = vsel %vm717, %v711, %v724
      %727 = vst [vmem:[%s366] sm:$0xff] %v725
      %728 = vst [vmem:[%s366 + $0x8] sm:$0xf] %v713
      %s729 = smul.u32 3, %s21
      %p730 = scmp.lt.s32.totalorder %s22, 1
      %s731 = scalar_select %p730, %s22, 1
      %p732 = scmp.lt.s32.totalorder %s729, 2
      %s733 = scalar_select %p732, %s729, 2
      %s734 = smul.addr %s731, 3
      %s735 = sadd.s32 %s733, %s734
      %s736 = smul.addr %s735, 4
      %s737 = scalar_lea.vmem %s4, %s736
      %s738 = smul.u32 3, %s21
      %p739 = scmp.lt.s32.totalorder %s22, 1
      %s740 = scalar_select %p739, %s22, 1
      %p741 = scmp.lt.s32.totalorder %s738, 2
      %s742 = scalar_select %p741, %s738, 2
      %s743 = smul.addr %s740, 3
      %s744 = sadd.s32 %s742, %s743
      %s745 = smul.addr %s744, 4
      %s746 = scalar_lea.vmem %s5, %s745
      // Predicated region
      $region37: #{spectral_conv3d_uno_forward.1} parent=35 // pred_check
        %p747 = pneg %p157
      $region38: #{spectral_conv3d_uno_forward.1} parent=35 // pred_check_branch
        %749 = sbr.rel (%p747) target = $region40
      $region39: #{spectral_conv3d_uno_forward.1} parent=35 // pred_region
        %s750 = smul.u32 3, %s21
      $region40: #{spectral_conv3d_uno_forward.1} parent=35 // pred_fallthru
        _
      // Predicated region
      $region41: #{spectral_conv3d_uno_forward.1} parent=35 // pred_check
        %p751 = pneg %p185
      $region42: #{spectral_conv3d_uno_forward.1} parent=35 // pred_check_branch
        %753 = sbr.rel (%p751) target = $region44
      $region43: #{spectral_conv3d_uno_forward.1} parent=35 // pred_region
        %s754 = smul.u32 3, %s21
      $region44: #{spectral_conv3d_uno_forward.1} parent=35 // pred_fallthru
        _
    $region36: #{spectral_conv3d_uno_forward.1} parent=5 // pred_fallthru
      _
    %p755 = scmp.le.s32.totalorder 2, %s12
    // Predicated region
    $region45: #{spectral_conv3d_uno_forward.1} parent=5 // pred_check
      %p756 = pneg %p755
    $region46: #{spectral_conv3d_uno_forward.1} parent=5 // pred_check_branch
      %758 = sbr.rel (%p756) target = $region48
    $region47: #{spectral_conv3d_uno_forward.1} parent=5 // pred_region
      %s759 = ssub.s32 %s12, 2
      // Predicated region
      $region49: #{spectral_conv3d_uno_forward.1} parent=47 // pred_check
        %p760 = pneg %p163
      $region50: #{spectral_conv3d_uno_forward.1} parent=47 // pred_check_branch
        %762 = sbr.rel (%p760) target = $region52
      $region51: #{spectral_conv3d_uno_forward.1} parent=47 // pred_region
        %s763 = smul.u32 3, %s23
        %p764 = scmp.lt.s32.totalorder %s24, 1
        %s765 = scalar_select %p764, %s24, 1
        %p766 = scmp.lt.s32.totalorder %s763, 2
        %s767 = scalar_select %p766, %s763, 2
        %s768 = smul.addr %s765, 3
        %s769 = sadd.s32 %s767, %s768
        %s770 = smul.addr %s769, 4
        %s771 = scalar_lea.vmem %s4, %s770
      $region52: #{spectral_conv3d_uno_forward.1} parent=47 // pred_fallthru
        _
      // Predicated region
      $region53: #{spectral_conv3d_uno_forward.1} parent=47 // pred_check
        %p772 = pneg %p191
      $region54: #{spectral_conv3d_uno_forward.1} parent=47 // pred_check_branch
        %774 = sbr.rel (%p772) target = $region56
      $region55: #{spectral_conv3d_uno_forward.1} parent=47 // pred_region
        %s775 = smul.u32 3, %s23
        %p776 = scmp.lt.s32.totalorder %s24, 1
        %s777 = scalar_select %p776, %s24, 1
        %p778 = scmp.lt.s32.totalorder %s775, 2
        %s779 = scalar_select %p778, %s775, 2
        %s780 = smul.addr %s777, 3
        %s781 = sadd.s32 %s779, %s780
        %s782 = smul.addr %s781, 4
        %s783 = scalar_lea.vmem %s5, %s782
      $region56: #{spectral_conv3d_uno_forward.1} parent=47 // pred_fallthru
        _
    $region48: #{spectral_conv3d_uno_forward.1} parent=5 // pred_fallthru
      _
  $region6: #{spectral_conv3d_uno_forward.1} parent=0 // loop_footer
    %s16 = sadd.s32 1, %s12
  $region7: #{spectral_conv3d_uno_forward.1} parent=0 // loop_footer_branch
    %11 = sbr.rel target = $region3
  $region8: #{spectral_conv3d_uno_forward.1} parent=0 // loop_exit
    _

// kernel: reverse.1
$region0: #{reverse.1}
  #allocation0 [shape = 's32[1]{0}', space=sflag, size = 0x4, scoped, tag = 'scoped memory for reverse.1']
  %s0 = inlined_call_operand.vmem [shape: f32[2,4,8,8,3], index: 0, kind: input, shape index: {}]
  %s1 = inlined_call_operand.vmem [shape: f32[2,4,8,8,3], index: 1, kind: output, shape index: {}]
  %s2 = scalar_lea.vmem %s0, 16
  %v3 = vld [vmem:[%s2] sm:$0xff]
  %4 = vst [vmem:[%s1] sm:$0xff] %v3
  %s5 = scalar_lea.vmem %s0, 112
  %v6 = vld [vmem:[%s5] sm:$0xff]
  %s7 = scalar_lea.vmem %s1, 96
  %8 = vst [vmem:[%s7] sm:$0xff] %v6
  %s9 = scalar_lea.vmem %s0, 40
  %v10 = vld [vmem:[%s9] sm:$0xff]
  %s11 = scalar_lea.vmem %s1, 24
  %12 = vst [vmem:[%s11] sm:$0xff] %v10
  %s13 = scalar_lea.vmem %s0, 136
  %v14 = vld [vmem:[%s13] sm:$0xff]
  %s15 = scalar_lea.vmem %s1, 120
  %16 = vst [vmem:[%s15] sm:$0xff] %v14
  %s17 = scalar_lea.vmem %s0, 64
  %v18 = vld [vmem:[%s17] sm:$0xff]
  %s19 = scalar_lea.vmem %s1, 48
  %20 = vst [vmem:[%s19] sm:$0xff] %v18
  %s21 = scalar_lea.vmem %s0, 160
  %v22 = vld [vmem:[%s21] sm:$0xff]
  %s23 = scalar_lea.vmem %s1, 144
  %24 = vst [vmem:[%s23] sm:$0xff] %v22
  %s25 = scalar_lea.vmem %s0, 88
  %v26 = vld [vmem:[%s25] sm:$0xff]
  %s27 = scalar_lea.vmem %s1, 72
  %28 = vst [vmem:[%s27] sm:$0xff] %v26
  %s29 = scalar_lea.vmem %s0, 184
  %v30 = vld [vmem:[%s29] sm:$0xff]
  %s31 = scalar_lea.vmem %s1, 168
  %32 = vst [vmem:[%s31] sm:$0xff] %v30
  %s33 = scalar_lea.vmem %s0, 8
  %v34 = vld [vmem:[%s33] sm:$0xff]
  %s35 = scalar_lea.vmem %s1, 8
  %36 = vst [vmem:[%s35] sm:$0xff] %v34
  %s37 = scalar_lea.vmem %s0, 104
  %v38 = vld [vmem:[%s37] sm:$0xff]
  %s39 = scalar_lea.vmem %s1, 104
  %40 = vst [vmem:[%s39] sm:$0xff] %v38
  %s41 = scalar_lea.vmem %s0, 32
  %v42 = vld [vmem:[%s41] sm:$0xff]
  %s43 = scalar_lea.vmem %s1, 32
  %44 = vst [vmem:[%s43] sm:$0xff] %v42
  %s45 = scalar_lea.vmem %s0, 128
  %v46 = vld [vmem:[%s45] sm:$0xff]
  %s47 = scalar_lea.vmem %s1, 128
  %48 = vst [vmem:[%s47] sm:$0xff] %v46
  %s49 = scalar_lea.vmem %s0, 56
  %v50 = vld [vmem:[%s49] sm:$0xff]
  %s51 = scalar_lea.vmem %s1, 56
  %52 = vst [vmem:[%s51] sm:$0xff] %v50
  %s53 = scalar_lea.vmem %s0, 152
  %v54 = vld [vmem:[%s53] sm:$0xff]
  %s55 = scalar_lea.vmem %s1, 152
  %56 = vst [vmem:[%s55] sm:$0xff] %v54
  %s57 = scalar_lea.vmem %s0, 80
  %v58 = vld [vmem:[%s57] sm:$0xff]
  %s59 = scalar_lea.vmem %s1, 80
  %60 = vst [vmem:[%s59] sm:$0xff] %v58
  %s61 = scalar_lea.vmem %s0, 176
  %v62 = vld [vmem:[%s61] sm:$0xff]
  %s63 = scalar_lea.vmem %s1, 176
  %64 = vst [vmem:[%s63] sm:$0xff] %v62
  %v65 = vld [vmem:[%s0] sm:$0xff]
  %s66 = scalar_lea.vmem %s1, 16
  %67 = vst [vmem:[%s66] sm:$0xff] %v65
  %s68 = scalar_lea.vmem %s0, 96
  %v69 = vld [vmem:[%s68] sm:$0xff]
  %s70 = scalar_lea.vmem %s1, 112
  %71 = vst [vmem:[%s70] sm:$0xff] %v69
  %s72 = scalar_lea.vmem %s0, 24
  %v73 = vld [vmem:[%s72] sm:$0xff]
  %s74 = scalar_lea.vmem %s1, 40
  %75 = vst [vmem:[%s74] sm:$0xff] %v73
  %s76 = scalar_lea.vmem %s0, 120
  %v77 = vld [vmem:[%s76] sm:$0xff]
  %s78 = scalar_lea.vmem %s1, 136
  %79 = vst [vmem:[%s78] sm:$0xff] %v77
  %s80 = scalar_lea.vmem %s0, 48
  %v81 = vld [vmem:[%s80] sm:$0xff]
  %s82 = scalar_lea.vmem %s1, 64
  %83 = vst [vmem:[%s82] sm:$0xff] %v81
  %s84 = scalar_lea.vmem %s0, 144
  %v85 = vld [vmem:[%s84] sm:$0xff]
  %s86 = scalar_lea.vmem %s1, 160
  %87 = vst [vmem:[%s86] sm:$0xff] %v85
  %s88 = scalar_lea.vmem %s0, 72
  %v89 = vld [vmem:[%s88] sm:$0xff]
  %s90 = scalar_lea.vmem %s1, 88
  %91 = vst [vmem:[%s90] sm:$0xff] %v89
  %s92 = scalar_lea.vmem %s0, 168
  %v93 = vld [vmem:[%s92] sm:$0xff]
  %s94 = scalar_lea.vmem %s1, 184
  %95 = vst [vmem:[%s94] sm:$0xff] %v93

</llo_original>
